<compile_context>
chip_gen: v7x
topology: tpu7x:2x2x1
jax: 0.10.0
libtpu: 0.0.40
codegen_flags: <defaults>
</compile_context>

<pallas_src>
import functools
import logging

import jax
import jax.numpy as jnp
from jax import lax
from jax.experimental import pallas as pl
from jax.experimental.pallas import tpu as pltpu

log = logging.getLogger(__name__)

_EPS = 1e-6                       # kornia axis_angle_to_rotation_matrix Taylor threshold
_QEPS = 1e-8                      # kornia rotation_matrix_to_quaternion eps
_TINY = 1.1754943508222875e-38    # torch.finfo(float32).tiny (safe_zero_division clamp)
_DEFAULT_TILE_COLS = 32768        # batch columns per grid step; sweep 32K-128K (v7x: larger w/ vmem_limit_bytes)
_CHUNK = 8                        # sublane groups per in-kernel compute chunk (one vreg row)

# Cephes atanf constants (branchless in-kernel atan).
_TAN_3PI_8 = 2.414213562373095
_TAN_PI_8 = 0.41421356237309503
_PI_2 = 1.5707963267948966
_PI_4 = 0.7853981633974483


# --------------------------------------------------------------------------------------
# Layout plumbing: batch on (sublane-group, lane) = (nb, 128)
# --------------------------------------------------------------------------------------
def _to_lane_major(x_rows_by_n: jax.Array, n: int, tile_cols: int):
    """(rows, N) -> (rows, nb, 128) with nb a multiple of 8 lane-groups.

    Returns (array, grid, tb, n_padded).  Padding is <= 1023 columns; the grid uses cdiv
    so a partial last block is masked by Pallas instead of padding N up to g*tb*128.
    """
    rows = x_rows_by_n.shape[0]
    nb = pl.cdiv(n, _CHUNK * 128) * _CHUNK        # lane-groups, always a multiple of 8
    n_padded = nb * 128
    tb = max((min(tile_cols, n_padded) // (_CHUNK * 128)) * _CHUNK, _CHUNK)
    tb = min(tb, nb)
    g = pl.cdiv(nb, tb)
    # v7x megacore: keep >=2 "parallel" grid steps when the batch is big enough so both
    # TensorCores get work (harmless on single-TC v5e/v6e; skipped for small batches).
    if g < 2 and nb >= 8 * _CHUNK:
        tb = ((nb // 2 + _CHUNK - 1) // _CHUNK) * _CHUNK
        g = pl.cdiv(nb, tb)
    x = jnp.pad(x_rows_by_n, ((0, 0), (0, n_padded - n)))   # single pad, <=1023 columns
    return x.reshape(rows, nb, 128), g, tb, n_padded


# --------------------------------------------------------------------------------------
# In-kernel helpers (all f32, (8, 128) slabs)
# --------------------------------------------------------------------------------------
def _atan_cephes(t):
    """Branchless f32 atan over the full real line (handles +/-inf); ~2e-7 peak error.

    Cephes atanf range reduction + odd polynomial — only mul/add/div/select, so Mosaic
    lowers it with plain VPU ops (no reliance on inverse-trig lowering).
    """
    a = jnp.abs(t)
    big = a > _TAN_3PI_8
    mid = a > _TAN_PI_8
    x = jnp.where(big, -1.0 / jnp.maximum(a, _TINY),
                  jnp.where(mid, (a - 1.0) / (a + 1.0), a))
    off = jnp.where(big, _PI_2, jnp.where(mid, _PI_4, 0.0))
    z = x * x
    p = (((8.05374449538e-2 * z - 1.38776856032e-1) * z
          + 1.99777106478e-1) * z - 3.33329491539e-1) * z * x + x
    y = off + p
    return jnp.where(t < 0.0, -y, y)


def _quat_from_chunk(m):
    """(9, 8, 128) f32 flat rot-mat chunk -> (w, x, y, z) slabs (kornia semantics)."""
    m00, m01, m02 = m[0], m[1], m[2]
    m10, m11, m12 = m[3], m[4], m[5]
    m20, m21, m22 = m[6], m[7], m[8]
    trace = m00 + m11 + m22

    sq_t = jnp.sqrt(trace + 1.0 + _QEPS) * 2.0              # trace > 0 branch
    sq_x = jnp.sqrt(1.0 + m00 - m11 - m22 + _QEPS) * 2.0    # m00 dominant
    sq_y = jnp.sqrt(1.0 + m11 - m00 - m22 + _QEPS) * 2.0    # m11 dominant
    sq_z = jnp.sqrt(1.0 + m22 - m00 - m11 + _QEPS) * 2.0    # m22 dominant

    # 4 reciprocals of the clamped denominators replace 12 full divides (review item).
    inv_t = 1.0 / jnp.maximum(sq_t, _TINY)
    inv_x = 1.0 / jnp.maximum(sq_x, _TINY)
    inv_y = 1.0 / jnp.maximum(sq_y, _TINY)
    inv_z = 1.0 / jnp.maximum(sq_z, _TINY)

    ct = trace > 0.0
    cx = (m00 > m11) & (m00 > m22)
    cy = m11 > m22

    def sel(q_t, q_x, q_y, q_z):                             # kornia's nested torch.where
        return jnp.where(ct, q_t, jnp.where(cx, q_x, jnp.where(cy, q_y, q_z)))

    d_wx, d_wy, d_wz = m21 - m12, m02 - m20, m10 - m01
    s_xy, s_xz, s_yz = m01 + m10, m02 + m20, m12 + m21

    qw = sel(0.25 * sq_t, d_wx * inv_x, d_wy * inv_y, d_wz * inv_z)
    qx = sel(d_wx * inv_t, 0.25 * sq_x, s_xy * inv_y, s_xz * inv_z)
    qy = sel(d_wy * inv_t, s_xy * inv_x, 0.25 * sq_y, s_yz * inv_z)
    qz = sel(d_wz * inv_t, s_xz * inv_x, s_yz * inv_y, 0.25 * sq_z)
    return qw, qx, qy, qz


# --------------------------------------------------------------------------------------
# Kernel 1: axis-angle -> rotation matrix (Convert("aa_mat"))
# --------------------------------------------------------------------------------------
def _aa_to_rotmat_kernel(x_ref, o_ref):
    out_dtype = o_ref.dtype
    nchunks = x_ref.shape[1] // _CHUNK

    def chunk(ci, carry):
        sl = pl.ds(pl.multiple_of(ci * _CHUNK, _CHUNK), _CHUNK)
        x = x_ref[:, sl, :].astype(jnp.float32)             # (3, 8, 128)
        rx, ry, rz = x[0], x[1], x[2]
        theta2 = rx * rx + ry * ry + rz * rz
        theta = jnp.sqrt(theta2)
        inv = 1.0 / (theta + _EPS)       # exact divide (fix): HBM-bound, approx rcp only cost accuracy
        wx, wy, wz = rx * inv, ry * inv, rz * inv
        c = jnp.cos(theta)               # jnp.cos/sin rely on Mosaic's transcendental lowering
        s = jnp.sin(theta)
        omc = 1.0 - c
        one = jnp.ones_like(rx)
        use_rodrigues = theta2 > _EPS

        def put(row, rodrigues, taylor):                     # per-row stores, no concatenate
            o_ref[row, sl, :] = jnp.where(use_rodrigues, rodrigues, taylor).astype(out_dtype)

        put(0, c + wx * wx * omc, one)
        put(1, wx * wy * omc - wz * s, -rz)
        put(2, wy * s + wx * wz * omc, ry)
        put(3, wz * s + wx * wy * omc, rz)
        put(4, c + wy * wy * omc, one)
        put(5, -wx * s + wy * wz * omc, -rx)
        put(6, -wy * s + wx * wz * omc, -ry)
        put(7, wx * s + wy * wz * omc, rx)
        put(8, c + wz * wz * omc, one)
        return carry

    # Rolled loop bounds live vregs to one 8-sublane chunk while the DMA block stays large.
    lax.fori_loop(0, nchunks, chunk, 0)


# --------------------------------------------------------------------------------------
# Kernel 2: rotation matrix -> quaternion (WXYZ) or fused axis-angle
# --------------------------------------------------------------------------------------
def _rotmat_kernel(m_ref, o_ref, *, mode):
    out_dtype = o_ref.dtype
    nchunks = m_ref.shape[1] // _CHUNK

    def chunk(ci, carry):
        sl = pl.ds(pl.multiple_of(ci * _CHUNK, _CHUNK), _CHUNK)
        m = m_ref[:, sl, :].astype(jnp.float32)              # (9, 8, 128)
        qw, qx, qy, qz = _quat_from_chunk(m)
        if mode == "quat":
            o_ref[0, sl, :] = qw.astype(out_dtype)
            o_ref[1, sl, :] = qx.astype(out_dtype)
            o_ref[2, sl, :] = qy.astype(out_dtype)
            o_ref[3, sl, :] = qz.astype(out_dtype)
        else:
            # Fused kornia quaternion_to_axis_angle: since sin>=0, kornia's
            # 2*atan2(+/-sin, +/-cos) (with cos<0 flip) is exactly 2*atan(sin/cos)
            # (cos==0 -> sin/cos=+inf -> atan=pi/2).  No quaternion HBM round trip.
            sin_sq = qx * qx + qy * qy + qz * qz
            sin_t = jnp.sqrt(sin_sq)
            two_theta = 2.0 * _atan_cephes(sin_t / qw)
            k = jnp.where(sin_sq > 0.0, two_theta / sin_t, 2.0)
            o_ref[0, sl, :] = (qx * k).astype(out_dtype)
            o_ref[1, sl, :] = (qy * k).astype(out_dtype)
            o_ref[2, sl, :] = (qz * k).astype(out_dtype)
        return carry

    lax.fori_loop(0, nchunks, chunk, 0)


# --------------------------------------------------------------------------------------
# Wrappers
# --------------------------------------------------------------------------------------
def axis_angle_to_rotation_matrix(axis_angle: jax.Array, *,
                                  tile_cols: int = _DEFAULT_TILE_COLS,
                                  return_flat: bool = False) -> jax.Array:
    """axis-angle (N, 3) -> rotation matrices (N, 3, 3) (kornia semantics).

    return_flat=True returns the lane-dense (9, N) slab (rows m00..m22), which the
    RotMat wrappers accept directly so composed pipelines skip all wrapper transposes.
    """
    n = axis_angle.shape[0]
    x3, g, tb, n_padded = _to_lane_major(axis_angle.T, n, tile_cols)
    out = pl.pallas_call(
        _aa_to_rotmat_kernel,
        out_shape=jax.ShapeDtypeStruct((9, x3.shape[1], 128), axis_angle.dtype),
        grid=(g,),
        in_specs=[pl.BlockSpec((3, tb, 128), lambda i: (0, i, 0))],
        out_specs=pl.BlockSpec((9, tb, 128), lambda i: (0, i, 0)),
        compiler_params=pltpu.CompilerParams(dimension_semantics=("parallel",)),
    )(x3)
    flat = out.reshape(9, n_padded)[:, :n]
    if return_flat:
        return flat
    # Layout-only pass kept solely to honor the (N, 3, 3) module contract.
    return flat.T.reshape(n, 3, 3)


def _rotmat_convert(rot_mat: jax.Array, *, mode: str, out_rows: int,
                    tile_cols: int, return_flat: bool) -> jax.Array:
    if rot_mat.ndim == 2 and rot_mat.shape[0] == 9:
        n = rot_mat.shape[1]
        flat_in = rot_mat                       # already the lane-dense (9, N) slab
    else:
        n = rot_mat.shape[0]
        flat_in = rot_mat.reshape(n, 9).T       # layout pass to honor the (N,3,3) contract
    m9, g, tb, n_padded = _to_lane_major(flat_in, n, tile_cols)
    out = pl.pallas_call(
        functools.partial(_rotmat_kernel, mode=mode),
        out_shape=jax.ShapeDtypeStruct((out_rows, m9.shape[1], 128), rot_mat.dtype),
        grid=(g,),
        in_specs=[pl.BlockSpec((9, tb, 128), lambda i: (0, i, 0))],
        out_specs=pl.BlockSpec((out_rows, tb, 128), lambda i: (0, i, 0)),
        compiler_params=pltpu.CompilerParams(dimension_semantics=("parallel",)),
    )(m9)
    flat = out.reshape(out_rows, n_padded)[:, :n]
    if return_flat:
        return flat                             # (out_rows, N) lane-dense
    return flat.T                               # (N, out_rows) module layout


def rotation_matrix_to_quaternion(rot_mat: jax.Array, *,
                                  tile_cols: int = _DEFAULT_TILE_COLS,
                                  return_flat: bool = False) -> jax.Array:
    """rotation matrices (N,3,3) [or flat (9,N)] -> quaternions (N,4), (w,x,y,z)."""
    return _rotmat_convert(rot_mat, mode="quat", out_rows=4,
                           tile_cols=tile_cols, return_flat=return_flat)


def rotation_matrix_to_axis_angle(rot_mat: jax.Array, *,
                                  tile_cols: int = _DEFAULT_TILE_COLS,
                                  return_flat: bool = False) -> jax.Array:
    """rotation matrices (N,3,3) [or flat (9,N)] -> axis-angle (N,3), fused in one kernel."""
    return _rotmat_convert(rot_mat, mode="axis_angle", out_rows=3,
                           tile_cols=tile_cols, return_flat=return_flat)


# --------------------------------------------------------------------------------------
# Module-level wrappers
# --------------------------------------------------------------------------------------
class RotMat:
    """JAX/Pallas port of moai ...conversions.RotMat (rot-mat -> axis-angle / quaternion)."""

    def __init__(self, to: str = "axis_angle"):
        if to == "axis_angle":
            self.convert_func = rotation_matrix_to_axis_angle
        elif to == "quat":
            self.convert_func = rotation_matrix_to_quaternion
        else:
            log.error(f"The selected rotational convertion {to} is not supported. "
                      "Please enter a valid one to continue.")
            self.convert_func = None

    def __call__(self, rot_mat: jax.Array) -> jax.Array:
        return self.convert_func(rot_mat)


class Convert:
    """JAX/Pallas port of moai ...conversions.Convert ('aa_mat' path)."""

    def __init__(self, from_to: str):
        f, t = from_to.split("_")
        if f != "aa":
            raise ValueError(f"Unsupported source rotation type: {f}")
        if t == "mat":
            self._fn = axis_angle_to_rotation_matrix
        else:
            # TODO(synk): 'aa_quat' path (angle_axis_to_quaternion) not implemented.
            raise NotImplementedError(f"Unsupported conversion target: {t}")

    def __call__(self, rotation: jax.Array) -> jax.Array:
        return self._fn(rotation)


# --------------------------------------------------------------------------------------
# Pure-JAX references (mirror kornia)
# --------------------------------------------------------------------------------------
def _ref_aa_to_mat(aa: jax.Array) -> jax.Array:
    rx, ry, rz = aa[:, 0:1], aa[:, 1:2], aa[:, 2:3]
    theta2 = rx * rx + ry * ry + rz * rz
    theta = jnp.sqrt(theta2)
    inv = 1.0 / (theta + _EPS)
    wx, wy, wz = rx * inv, ry * inv, rz * inv
    c, s = jnp.cos(theta), jnp.sin(theta)
    omc = 1.0 - c
    normal = jnp.concatenate(
        [c + wx * wx * omc, wx * wy * omc - wz * s, wy * s + wx * wz * omc,
         wz * s + wx * wy * omc, c + wy * wy * omc, -wx * s + wy * wz * omc,
         -wy * s + wx * wz * omc, wx * s + wy * wz * omc, c + wz * wz * omc],
        axis=1)
    one = jnp.ones_like(rx)
    taylor = jnp.concatenate([one, -rz, ry, rz, one, -rx, -ry, rx, one], axis=1)
    return jnp.where(theta2 > _EPS, normal, taylor).reshape(-1, 3, 3)


def _ref_rotmat_to_quaternion(rot_mat: jax.Array) -> jax.Array:
    v = rot_mat.reshape(rot_mat.shape[0], 9)
    m00, m01, m02, m10, m11, m12, m20, m21, m22 = [v[:, i] for i in range(9)]
    trace = m00 + m11 + m22

    def sdiv(num, den):
        return num / jnp.maximum(den, _TINY)

    sq_t = jnp.sqrt(trace + 1.0 + _QEPS) * 2.0
    q_t = jnp.stack([0.25 * sq_t, sdiv(m21 - m12, sq_t),
                     sdiv(m02 - m20, sq_t), sdiv(m10 - m01, sq_t)], -1)
    sq_x = jnp.sqrt(1.0 + m00 - m11 - m22 + _QEPS) * 2.0
    q_x = jnp.stack([sdiv(m21 - m12, sq_x), 0.25 * sq_x,
                     sdiv(m01 + m10, sq_x), sdiv(m02 + m20, sq_x)], -1)
    sq_y = jnp.sqrt(1.0 + m11 - m00 - m22 + _QEPS) * 2.0
    q_y = jnp.stack([sdiv(m02 - m20, sq_y), sdiv(m01 + m10, sq_y),
                     0.25 * sq_y, sdiv(m12 + m21, sq_y)], -1)
    sq_z = jnp.sqrt(1.0 + m22 - m00 - m11 + _QEPS) * 2.0
    q_z = jnp.stack([sdiv(m10 - m01, sq_z), sdiv(m02 + m20, sq_z),
                     sdiv(m12 + m21, sq_z), 0.25 * sq_z], -1)
    ct = (trace > 0.0)[:, None]
    cx = ((m00 > m11) & (m00 > m22))[:, None]
    cy = (m11 > m22)[:, None]
    return jnp.where(ct, q_t, jnp.where(cx, q_x, jnp.where(cy, q_y, q_z)))


def _ref_quaternion_to_axis_angle(quaternion: jax.Array) -> jax.Array:
    cos_theta = quaternion[..., 0]
    q1, q2, q3 = quaternion[..., 1], quaternion[..., 2], quaternion[..., 3]
    sin_sq = q1 * q1 + q2 * q2 + q3 * q3
    sin_theta = jnp.sqrt(sin_sq)
    two_theta = 2.0 * jnp.where(cos_theta < 0.0,
                                jnp.arctan2(-sin_theta, -cos_theta),
                                jnp.arctan2(sin_theta, cos_theta))
    k = jnp.where(sin_sq > 0.0, two_theta / sin_theta, jnp.full_like(sin_theta, 2.0))
    return jnp.stack([q1 * k, q2 * k, q3 * k], axis=-1)


if __name__ == "__main__":
    key = jax.random.PRNGKey(0)
    N = 8
    aa = jax.random.normal(key, (N, 3), dtype=jnp.float32)
    # Force one near-zero rotation to exercise Taylor / near-identity branches.
    aa = aa.at[0].set(jnp.array([1e-5, -2e-5, 5e-6], dtype=jnp.float32))

    # --- Convert('aa_mat'): axis-angle -> rotation matrix (previously reviewed kernel)
    R = jax.block_until_ready(Convert("aa_mat")(aa))
    R_ref = _ref_aa_to_mat(aa)
    assert R.shape == (N, 3, 3), R.shape
    assert jnp.allclose(R, R_ref, atol=1e-5, rtol=1e-5), "aa->mat mismatch vs reference"

    # --- RotMat (the spec): rotation matrix -> quaternion / axis-angle
    rot = R_ref  # exact, valid rotation matrices (incl. a near-identity one)

    q = jax.block_until_ready(RotMat("quat")(rot))
    q_ref = _ref_rotmat_to_quaternion(rot)
    assert q.shape == (N, 4), q.shape
    assert jnp.allclose(q, q_ref, atol=1e-5, rtol=1e-5), "mat->quat mismatch vs reference"

    aa_out = jax.block_until_ready(RotMat("axis_angle")(rot))
    aa_ref = _ref_quaternion_to_axis_angle(q_ref)
    assert aa_out.shape == (N, 3), aa_out.shape
    assert jnp.allclose(aa_out, aa_ref, atol=1e-5, rtol=1e-5), "mat->aa mismatch vs reference"

    # --- Flat lane-dense composition path (skips all wrapper-side transposes).
    R_flat = axis_angle_to_rotation_matrix(aa, return_flat=True)            # (9, N)
    q_flat = jax.block_until_ready(
        rotation_matrix_to_quaternion(R_flat, return_flat=True))            # (4, N)
    q_from_R = rotation_matrix_to_quaternion(R)                              # (N, 4)
    assert q_flat.shape == (4, N), q_flat.shape
    assert jnp.allclose(q_flat.T, q_from_R, atol=1e-6, rtol=0.0), "flat-path mismatch"

    print("KERNEL_OK")
</pallas_src>

<mosaic_0001>
module attributes {stable_mosaic.version = 11 : i64} {
  func.func @_aa_to_rotmat_kernel(%arg0: i32, %arg1: memref<3x8x128xf32, #tpu.memory_space<vmem>>, %arg2: memref<9x8x128xf32, #tpu.memory_space<vmem>>) attributes {dimension_semantics = [#tpu.dimension_semantics<parallel>], iteration_bounds = array<i64: 1>, scalar_prefetch = 0 : i64, scratch_operands = 0 : i64, tpu.core_type = #tpu.core_type<tc>, window_params = [{transform_indices = @transform_0, window_bounds = array<i64: 3, 8, 128>}, {transform_indices = @transform_1, window_bounds = array<i64: 9, 8, 128>}]} {
    %c0_i32 = arith.constant 0 : i32
    %c8_i32 = arith.constant 8 : i32
    %0 = arith.muli %c0_i32, %c8_i32 : i32
    %1 = tpu.assume_multiple %0, 8 : i32
    %c0 = arith.constant 0 : index
    %2 = arith.index_cast %1 : i32 to index
    %c0_0 = arith.constant 0 : index
    %3 = vector.load %arg1[%c0, %2, %c0_0] : memref<3x8x128xf32, #tpu.memory_space<vmem>>, vector<3x8x128xf32>
    %4 = vector.extract_strided_slice %3 {offsets = [0, 0, 0], sizes = [1, 8, 128], strides = [1, 1, 1]} : vector<3x8x128xf32> to vector<1x8x128xf32>
    %5 = vector.shape_cast %4 : vector<1x8x128xf32> to vector<8x128xf32>
    %6 = vector.extract_strided_slice %3 {offsets = [1, 0, 0], sizes = [1, 8, 128], strides = [1, 1, 1]} : vector<3x8x128xf32> to vector<1x8x128xf32>
    %7 = vector.shape_cast %6 : vector<1x8x128xf32> to vector<8x128xf32>
    %8 = vector.extract_strided_slice %3 {offsets = [2, 0, 0], sizes = [1, 8, 128], strides = [1, 1, 1]} : vector<3x8x128xf32> to vector<1x8x128xf32>
    %9 = vector.shape_cast %8 : vector<1x8x128xf32> to vector<8x128xf32>
    %10 = arith.mulf %5, %5 : vector<8x128xf32>
    %11 = arith.mulf %7, %7 : vector<8x128xf32>
    %12 = arith.addf %10, %11 : vector<8x128xf32>
    %13 = arith.mulf %9, %9 : vector<8x128xf32>
    %14 = arith.addf %12, %13 : vector<8x128xf32>
    %15 = math.sqrt %14 : vector<8x128xf32>
    %cst = arith.constant 9.99999997E-7 : f32
    %16 = vector.broadcast %cst : f32 to vector<8x128xf32>
    %17 = arith.addf %15, %16 : vector<8x128xf32>
    %cst_1 = arith.constant 1.000000e+00 : f32
    %18 = vector.broadcast %cst_1 : f32 to vector<8x128xf32>
    %19 = arith.divf %18, %17 : vector<8x128xf32>
    %20 = arith.mulf %5, %19 : vector<8x128xf32>
    %21 = arith.mulf %7, %19 : vector<8x128xf32>
    %22 = arith.mulf %9, %19 : vector<8x128xf32>
    %23 = math.cos %15 : vector<8x128xf32>
    %24 = math.sin %15 : vector<8x128xf32>
    %cst_2 = arith.constant 1.000000e+00 : f32
    %25 = vector.broadcast %cst_2 : f32 to vector<8x128xf32>
    %26 = arith.subf %25, %23 : vector<8x128xf32>
    %cst_3 = arith.constant 1.000000e+00 : f32
    %27 = vector.broadcast %cst_3 : f32 to vector<8x128xf32>
    %cst_4 = arith.constant 9.99999997E-7 : f32
    %28 = vector.broadcast %cst_4 : f32 to vector<8x128xf32>
    %29 = arith.cmpf ogt, %14, %28 : vector<8x128xf32>
    %30 = arith.mulf %20, %20 : vector<8x128xf32>
    %31 = arith.mulf %30, %26 : vector<8x128xf32>
    %32 = arith.addf %23, %31 : vector<8x128xf32>
    %33 = arith.select %29, %32, %27 : vector<8x128xi1>, vector<8x128xf32>
    %c0_5 = arith.constant 0 : index
    %34 = arith.index_cast %1 : i32 to index
    %c0_6 = arith.constant 0 : index
    %35 = vector.load %arg2[%c0_5, %34, %c0_6] : memref<9x8x128xf32, #tpu.memory_space<vmem>>, vector<1x8x128xf32>
    %36 = vector.shape_cast %35 : vector<1x8x128xf32> to vector<8x128xf32>
    %37 = vector.shape_cast %33 : vector<8x128xf32> to vector<1x8x128xf32>
    tpu.vector_store %arg2[%c0_5, %34, %c0_6], %37 {strides = array<i32>} : memref<9x8x128xf32, #tpu.memory_space<vmem>>, vector<1x8x128xf32>,
    %38 = arith.mulf %20, %21 : vector<8x128xf32>
    %39 = arith.mulf %38, %26 : vector<8x128xf32>
    %40 = arith.mulf %22, %24 : vector<8x128xf32>
    %41 = arith.subf %39, %40 : vector<8x128xf32>
    %cst_7 = arith.constant 0.000000e+00 : f32
    %42 = vector.broadcast %cst_7 : f32 to vector<8x128xf32>
    %43 = arith.subf %42, %9 : vector<8x128xf32>
    %44 = arith.select %29, %41, %43 : vector<8x128xi1>, vector<8x128xf32>
    %c1 = arith.constant 1 : index
    %45 = arith.index_cast %1 : i32 to index
    %c0_8 = arith.constant 0 : index
    %46 = vector.load %arg2[%c1, %45, %c0_8] : memref<9x8x128xf32, #tpu.memory_space<vmem>>, vector<1x8x128xf32>
    %47 = vector.shape_cast %46 : vector<1x8x128xf32> to vector<8x128xf32>
    %48 = vector.shape_cast %44 : vector<8x128xf32> to vector<1x8x128xf32>
    tpu.vector_store %arg2[%c1, %45, %c0_8], %48 {strides = array<i32>} : memref<9x8x128xf32, #tpu.memory_space<vmem>>, vector<1x8x128xf32>,
    %49 = arith.mulf %21, %24 : vector<8x128xf32>
    %50 = arith.mulf %20, %22 : vector<8x128xf32>
    %51 = arith.mulf %50, %26 : vector<8x128xf32>
    %52 = arith.addf %49, %51 : vector<8x128xf32>
    %53 = arith.select %29, %52, %7 : vector<8x128xi1>, vector<8x128xf32>
    %c2 = arith.constant 2 : index
    %54 = arith.index_cast %1 : i32 to index
    %c0_9 = arith.constant 0 : index
    %55 = vector.load %arg2[%c2, %54, %c0_9] : memref<9x8x128xf32, #tpu.memory_space<vmem>>, vector<1x8x128xf32>
    %56 = vector.shape_cast %55 : vector<1x8x128xf32> to vector<8x128xf32>
    %57 = vector.shape_cast %53 : vector<8x128xf32> to vector<1x8x128xf32>
    tpu.vector_store %arg2[%c2, %54, %c0_9], %57 {strides = array<i32>} : memref<9x8x128xf32, #tpu.memory_space<vmem>>, vector<1x8x128xf32>,
    %58 = arith.mulf %22, %24 : vector<8x128xf32>
    %59 = arith.mulf %20, %21 : vector<8x128xf32>
    %60 = arith.mulf %59, %26 : vector<8x128xf32>
    %61 = arith.addf %58, %60 : vector<8x128xf32>
    %62 = arith.select %29, %61, %9 : vector<8x128xi1>, vector<8x128xf32>
    %c3 = arith.constant 3 : index
    %63 = arith.index_cast %1 : i32 to index
    %c0_10 = arith.constant 0 : index
    %64 = vector.load %arg2[%c3, %63, %c0_10] : memref<9x8x128xf32, #tpu.memory_space<vmem>>, vector<1x8x128xf32>
    %65 = vector.shape_cast %64 : vector<1x8x128xf32> to vector<8x128xf32>
    %66 = vector.shape_cast %62 : vector<8x128xf32> to vector<1x8x128xf32>
    tpu.vector_store %arg2[%c3, %63, %c0_10], %66 {strides = array<i32>} : memref<9x8x128xf32, #tpu.memory_space<vmem>>, vector<1x8x128xf32>,
    %67 = arith.mulf %21, %21 : vector<8x128xf32>
    %68 = arith.mulf %67, %26 : vector<8x128xf32>
    %69 = arith.addf %23, %68 : vector<8x128xf32>
    %70 = arith.select %29, %69, %27 : vector<8x128xi1>, vector<8x128xf32>
    %c4 = arith.constant 4 : index
    %71 = arith.index_cast %1 : i32 to index
    %c0_11 = arith.constant 0 : index
    %72 = vector.load %arg2[%c4, %71, %c0_11] : memref<9x8x128xf32, #tpu.memory_space<vmem>>, vector<1x8x128xf32>
    %73 = vector.shape_cast %72 : vector<1x8x128xf32> to vector<8x128xf32>
    %74 = vector.shape_cast %70 : vector<8x128xf32> to vector<1x8x128xf32>
    tpu.vector_store %arg2[%c4, %71, %c0_11], %74 {strides = array<i32>} : memref<9x8x128xf32, #tpu.memory_space<vmem>>, vector<1x8x128xf32>,
    %cst_12 = arith.constant 0.000000e+00 : f32
    %75 = vector.broadcast %cst_12 : f32 to vector<8x128xf32>
    %76 = arith.subf %75, %20 : vector<8x128xf32>
    %77 = arith.mulf %76, %24 : vector<8x128xf32>
    %78 = arith.mulf %21, %22 : vector<8x128xf32>
    %79 = arith.mulf %78, %26 : vector<8x128xf32>
    %80 = arith.addf %77, %79 : vector<8x128xf32>
    %cst_13 = arith.constant 0.000000e+00 : f32
    %81 = vector.broadcast %cst_13 : f32 to vector<8x128xf32>
    %82 = arith.subf %81, %5 : vector<8x128xf32>
    %83 = arith.select %29, %80, %82 : vector<8x128xi1>, vector<8x128xf32>
    %c5 = arith.constant 5 : index
    %84 = arith.index_cast %1 : i32 to index
    %c0_14 = arith.constant 0 : index
    %85 = vector.load %arg2[%c5, %84, %c0_14] : memref<9x8x128xf32, #tpu.memory_space<vmem>>, vector<1x8x128xf32>
    %86 = vector.shape_cast %85 : vector<1x8x128xf32> to vector<8x128xf32>
    %87 = vector.shape_cast %83 : vector<8x128xf32> to vector<1x8x128xf32>
    tpu.vector_store %arg2[%c5, %84, %c0_14], %87 {strides = array<i32>} : memref<9x8x128xf32, #tpu.memory_space<vmem>>, vector<1x8x128xf32>,
    %cst_15 = arith.constant 0.000000e+00 : f32
    %88 = vector.broadcast %cst_15 : f32 to vector<8x128xf32>
    %89 = arith.subf %88, %21 : vector<8x128xf32>
    %90 = arith.mulf %89, %24 : vector<8x128xf32>
    %91 = arith.mulf %20, %22 : vector<8x128xf32>
    %92 = arith.mulf %91, %26 : vector<8x128xf32>
    %93 = arith.addf %90, %92 : vector<8x128xf32>
    %cst_16 = arith.constant 0.000000e+00 : f32
    %94 = vector.broadcast %cst_16 : f32 to vector<8x128xf32>
    %95 = arith.subf %94, %7 : vector<8x128xf32>
    %96 = arith.select %29, %93, %95 : vector<8x128xi1>, vector<8x128xf32>
    %c6 = arith.constant 6 : index
    %97 = arith.index_cast %1 : i32 to index
    %c0_17 = arith.constant 0 : index
    %98 = vector.load %arg2[%c6, %97, %c0_17] : memref<9x8x128xf32, #tpu.memory_space<vmem>>, vector<1x8x128xf32>
    %99 = vector.shape_cast %98 : vector<1x8x128xf32> to vector<8x128xf32>
    %100 = vector.shape_cast %96 : vector<8x128xf32> to vector<1x8x128xf32>
    tpu.vector_store %arg2[%c6, %97, %c0_17], %100 {strides = array<i32>} : memref<9x8x128xf32, #tpu.memory_space<vmem>>, vector<1x8x128xf32>,
    %101 = arith.mulf %20, %24 : vector<8x128xf32>
    %102 = arith.mulf %21, %22 : vector<8x128xf32>
    %103 = arith.mulf %102, %26 : vector<8x128xf32>
    %104 = arith.addf %101, %103 : vector<8x128xf32>
    %105 = arith.select %29, %104, %5 : vector<8x128xi1>, vector<8x128xf32>
    %c7 = arith.constant 7 : index
    %106 = arith.index_cast %1 : i32 to index
    %c0_18 = arith.constant 0 : index
    %107 = vector.load %arg2[%c7, %106, %c0_18] : memref<9x8x128xf32, #tpu.memory_space<vmem>>, vector<1x8x128xf32>
    %108 = vector.shape_cast %107 : vector<1x8x128xf32> to vector<8x128xf32>
    %109 = vector.shape_cast %105 : vector<8x128xf32> to vector<1x8x128xf32>
    tpu.vector_store %arg2[%c7, %106, %c0_18], %109 {strides = array<i32>} : memref<9x8x128xf32, #tpu.memory_space<vmem>>, vector<1x8x128xf32>,
    %110 = arith.mulf %22, %22 : vector<8x128xf32>
    %111 = arith.mulf %110, %26 : vector<8x128xf32>
    %112 = arith.addf %23, %111 : vector<8x128xf32>
    %113 = arith.select %29, %112, %27 : vector<8x128xi1>, vector<8x128xf32>
    %c8 = arith.constant 8 : index
    %114 = arith.index_cast %1 : i32 to index
    %c0_19 = arith.constant 0 : index
    %115 = vector.load %arg2[%c8, %114, %c0_19] : memref<9x8x128xf32, #tpu.memory_space<vmem>>, vector<1x8x128xf32>
    %116 = vector.shape_cast %115 : vector<1x8x128xf32> to vector<8x128xf32>
    %117 = vector.shape_cast %113 : vector<8x128xf32> to vector<1x8x128xf32>
    tpu.vector_store %arg2[%c8, %114, %c0_19], %117 {strides = array<i32>} : memref<9x8x128xf32, #tpu.memory_space<vmem>>, vector<1x8x128xf32>,
    %c1_i32 = arith.constant 1 : i32
    return
  }
  func.func @transform_0(%arg0: i32) -> (i32, i32, i32) {
    %c0_i32 = arith.constant 0 : i32
    %c0_i32_0 = arith.constant 0 : i32
    %c0_i32_1 = arith.constant 0 : i32
    return %c0_i32, %arg0, %c0_i32_0 : i32, i32, i32
  }
  func.func @transform_1(%arg0: i32) -> (i32, i32, i32) {
    %c0_i32 = arith.constant 0 : i32
    %c0_i32_0 = arith.constant 0 : i32
    %c0_i32_1 = arith.constant 0 : i32
    return %c0_i32, %arg0, %c0_i32_0 : i32, i32, i32
  }
}

</mosaic_0001>

<llo_original>
// kernel: tpu_custom_call.1
$region0: #{tpu_custom_call.1}
  #allocation0 [shape = 'u32[]', space=smem, size = 0x4, offset = 0x4, fixed_abs, tag = 'smem constant byte address 0x4 - core index']
  #allocation1 [shape = 'u32[144,128]{1,0:T(1,128)}', space=vmem, size = 0x12000, scoped, tag = 'internal scratch']
  %s0 = inlined_call_operand.hbm [shape: f32[3,8,128], index: 0, kind: input, shape index: {}]
  %s1 = inlined_call_operand.hbm [shape: f32[9,8,128], index: 1, kind: output, shape index: {}]
  %s2 = sld [smem:[#allocation0]]
  $region18: #{tpu_custom_call.1} parent=0
    _
  %s4 = ssub.s32 1, %s2
  %s5 = scalar_select 0, %s4, %s2
  $region1: #{tpu_custom_call.1} parent=0
    #allocation2 [shape = 'u8[12288]{0}', space=vmem, size = 0x3000, scoped, tag = 'input window, operand 0, single buffered']
    #allocation3 [shape = 's32[1]{0}', space=sflag, size = 0x4, scoped, tag = 'scoped memory for tpu_custom_call.1']
    #allocation4 [shape = 's32[1]{0}', space=sflag, size = 0x4, scoped, tag = 'scoped memory for tpu_custom_call.1']
    #allocation5 [shape = 'u8[36864]{0}', space=vmem, size = 0x9000, scoped, tag = 'output window, operand 0, single buffered']
    %6 = vsyncpa [#allocation3], 0
    %7 = vsyncpa [#allocation4], 0
    // Predicated region
    $region2: #{tpu_custom_call.1} parent=1 // pred_check
      _
    $region3: #{tpu_custom_call.1} parent=1 // pred_check_branch
      %9 = sbr.rel (0) target = $region5
    $region4: #{tpu_custom_call.1} parent=1 // pred_region
      %s11 = ssub.s32 384, 384
      %12 = vsyncadd [#allocation3], %s11
      %s13 = sshll.u32 [#allocation2], 4
      %s14 = int_to_ptr.vmem [resolvable:$true] %s13
      %19 = dma.hbm_to_vmem [thread:$0]  %s0, 384, %s14, [#allocation3], 128, 128, 8
    $region5: #{tpu_custom_call.1} parent=1 // pred_fallthru
      _
    // Predicated region
    $region6: #{tpu_custom_call.1} parent=1 // pred_check
      _
    $region7: #{tpu_custom_call.1} parent=1 // pred_check_branch
      %21 = sbr.rel (0) target = $region9
    $region8: #{tpu_custom_call.1} parent=1 // pred_region
      %22 = dma.done [#allocation3], 384
    $region9: #{tpu_custom_call.1} parent=1 // pred_fallthru
      _
    %v23 = vld [vmem:[#allocation2] sm:$0xff]
    %v24 = vld [vmem:[#allocation2 + $0x8] sm:$0xff]
    %v25 = vld [vmem:[#allocation2 + $0x10] sm:$0xff]
    %v26 = vmul.f32 %v23, %v23
    %v27 = vmul.f32 %v24, %v24
    %v28 = vadd.f32 %v26, %v27
    %v29 = vmul.f32 %v25, %v25
    %v30 = vadd.f32 %v28, %v29
    %v31 = vrsqrt.pop %v30
    %v32 = vmul.f32 %v30, %v31
    %vm33 = vcmp.eq.f32.partialorder %v30, inf
    %v34 = vsel %vm33, %v30, %v32
    %vm35 = vcmp.eq.f32.partialorder %v30, 0.0
    %v36 = vand.u32 %v30, 2147483648
    %v37 = vsel %vm35, %v36, %v34
    %v38 = vadd.f32 %v37, 1e-06
    %v39 = vrcp.pop %v38
    %v40 = vmul.f32 1.0, %v39
    %v41 = vmul.f32 %v23, %v40
    %v42 = vmul.f32 %v24, %v40
    %v43 = vmul.f32 %v25, %v40
    %v44 = vand.u32 2147483647, %v37
    %vm45 = vcmp.le.f32.partialorder %v44, 0.7853982
    %vm46 = vcmp.lt.s32.totalorder %v37, 0
    %v47 = vand.u32 %v37, 2139095040
    %v48 = vshrl.u32 %v47, 23
    %v49 = vsub.s32 %v48, 127
    %v50 = vand.u32 2147483647, %v37
    %v51 = vand.u32 %v50, 8388607
    %v52 = vor.u32 %v51, 8388608
    %v53 = vsub.s32 0, %v52
    %v54 = vadd.s32 %v49, 1
    %vm55 = vcmp.gt.s32.totalorder %v54, 0
    %v56 = vsel %vm55, %v54, 0
    %v57 = vshrl.u32 %v56, 5
    %v58 = vand.u32 %v56, 31
    %v59 = vsub.s32 32, %v58
    %v60 = vshrl.u32 683565275, %v59
    %v61 = vshll.u32 683565275, %v58
    %v62 = vshrl.u32 2475754826, %v59
    %v63 = vor.u32 %v61, %v62
    %v64 = vshll.u32 2475754826, %v58
    %v65 = vshrl.u32 2131351028, %v59
    %v66 = vor.u32 %v64, %v65
    %v67 = vshll.u32 2131351028, %v58
    %v68 = vshrl.u32 2102212464, %v59
    %v69 = vor.u32 %v67, %v68
    %v70 = vshll.u32 2102212464, %v58
    %v71 = vshrl.u32 920167782, %v59
    %v72 = vor.u32 %v70, %v71
    %v73 = vshll.u32 920167782, %v58
    %v74 = vshrl.u32 1326507024, %v59
    %v75 = vor.u32 %v73, %v74
    %vm76 = vcmp.lt.s32.totalorder %v57, 1
    %vm77 = vcmp.lt.s32.totalorder %v57, 2
    %vm78 = vcmp.lt.s32.totalorder %v57, 3
    %vm79 = vcmp.lt.s32.totalorder %v57, 4
    %v80 = vsel %vm76, %v60, %v63
    %v81 = vsel %vm79, %v69, 2102212464
    %v82 = vsel %vm78, %v66, %v81
    %v83 = vsel %vm77, %v80, %v82
    %v84 = vsel %vm76, %v63, %v66
    %v85 = vsel %vm79, %v72, 920167782
    %v86 = vsel %vm78, %v69, %v85
    %v87 = vsel %vm77, %v84, %v86
    %v88 = vsel %vm76, %v66, %v69
    %v89 = vsel %vm79, %v75, 1326507024
    %v90 = vsel %vm78, %v72, %v89
    %v91 = vsel %vm77, %v88, %v90
    %v92 = vshll.u32 %v52, 8
    %v93 = vmul.u32.u64.compose %v92, %v91
    %v94 = vextract.low.u32 %v93
    %v95 = vextract.high.u32 %v93
    %v96 = vmul.u32.u64.compose %v92, %v87
    %v97 = vextract.low.u32 %v96
    %v98 = vextract.high.u32 %v96
    %v99 = vmul.u32 %v92, %v83
    %v100 = vadd.s32 %v95, %v97
    %vm101 = vc.u32 %v95, %v97
    %v102 = vadd.s32 %v98, 1
    %v103 = vsel %vm101, %v102, %v98
    %v104 = vadd.s32 %v99, %v103
    %v105 = vadd.s32 %v104, 536870912
    %v106 = vshrl.u32 %v105, 30
    %v107 = vshll.u32 %v106, 30
    %v108 = vsub.s32 %v104, %v107
    %vm109 = vcmp.lt.s32.totalorder %v108, 0
    %v110 = vsub.s32 0, %v108
    %v111 = vsel %vm109, %v110, %v108
    %v112 = vclz %v111
    %v113 = vsub.s32 %v112, 2
    %vm114 = vcmp.gt.s32.totalorder 0, %v113
    %v115 = vsel %vm114, 0, %v113
    %v116 = vsub.s32 32, %v115
    %v117 = vshll.u32 %v108, %v115
    %v118 = vshrl.u32 %v100, %v116
    %v119 = vor.u32 %v117, %v118
    %v120 = vsub.s32 4294967266, %v115
    %v121 = vadd.s32 %v120, 127
    %v122 = vshll.u32 %v121, 23
    %v123 = vor.u32 4788187, %v122
    %v124 = vand.u32 2147483647, %v123
    %v126 = vcvt.s32.f32 %v119
    %v127 = vmul.f32 %v126, %v124
    %v128 = vxor.u32 %v127, 2147483648
    %v129 = vsel %vm46, %v128, %v127
    %v130 = vsub.s32 4, %v106
    %v131 = vsel %vm46, %v130, %v106
    %v132 = vsel %vm45, %v37, %v129
    %v133 = vsel %vm45, 0, %v131
    %v134 = vcosq.f32.pop %v132
    %v135 = vsinq.f32.pop %v132
    %vm136 = vweird.f32 %v37
    %v137 = vand.u32 %v133, 3
    %vm138 = vcmp.lt.s32.totalorder %v137, 2
    %vm139 = vcmp.eq.s32.totalorder %v137, 0
    %v140 = vxor.u32 %v135, 2147483648
    %v141 = vsel %vm139, %v134, %v140
    %vm142 = vcmp.eq.s32.totalorder %v137, 2
    %v143 = vxor.u32 %v134, 2147483648
    %v144 = vsel %vm142, %v143, %v135
    %v145 = vsel %vm138, %v141, %v144
    %v146 = vsel %vm136, nan, %v145
    %v147 = vand.u32 2147483647, %v37
    %vm148 = vcmp.le.f32.partialorder %v147, 0.7853982
    %vm149 = vcmp.lt.s32.totalorder %v37, 0
    %v150 = vand.u32 %v37, 2139095040
    %v151 = vshrl.u32 %v150, 23
    %v152 = vsub.s32 %v151, 127
    %v153 = vand.u32 2147483647, %v37
    %v154 = vand.u32 %v153, 8388607
    %v155 = vor.u32 %v154, 8388608
    %v156 = vsub.s32 0, %v155
    %v157 = vadd.s32 %v152, 1
    %vm158 = vcmp.gt.s32.totalorder %v157, 0
    %v159 = vsel %vm158, %v157, 0
    %v160 = vshrl.u32 %v159, 5
    %v161 = vand.u32 %v159, 31
    %v162 = vsub.s32 32, %v161
    %v163 = vshrl.u32 683565275, %v162
    %v164 = vshll.u32 683565275, %v161
    %v165 = vshrl.u32 2475754826, %v162
    %v166 = vor.u32 %v164, %v165
    %v167 = vshll.u32 2475754826, %v161
    %v168 = vshrl.u32 2131351028, %v162
    %v169 = vor.u32 %v167, %v168
    %v170 = vshll.u32 2131351028, %v161
    %v171 = vshrl.u32 2102212464, %v162
    %v172 = vor.u32 %v170, %v171
    %v173 = vshll.u32 2102212464, %v161
    %v174 = vshrl.u32 920167782, %v162
    %v175 = vor.u32 %v173, %v174
    %v176 = vshll.u32 920167782, %v161
    %v177 = vshrl.u32 1326507024, %v162
    %v178 = vor.u32 %v176, %v177
    %vm179 = vcmp.lt.s32.totalorder %v160, 1
    %vm180 = vcmp.lt.s32.totalorder %v160, 2
    %vm181 = vcmp.lt.s32.totalorder %v160, 3
    %vm182 = vcmp.lt.s32.totalorder %v160, 4
    %v183 = vsel %vm179, %v163, %v166
    %v184 = vsel %vm182, %v172, 2102212464
    %v185 = vsel %vm181, %v169, %v184
    %v186 = vsel %vm180, %v183, %v185
    %v187 = vsel %vm179, %v166, %v169
    %v188 = vsel %vm182, %v175, 920167782
    %v189 = vsel %vm181, %v172, %v188
    %v190 = vsel %vm180, %v187, %v189
    %v191 = vsel %vm179, %v169, %v172
    %v192 = vsel %vm182, %v178, 1326507024
    %v193 = vsel %vm181, %v175, %v192
    %v194 = vsel %vm180, %v191, %v193
    %v195 = vshll.u32 %v155, 8
    %v196 = vmul.u32.u64.compose %v195, %v194
    %v197 = vextract.low.u32 %v196
    %v198 = vextract.high.u32 %v196
    %v199 = vmul.u32.u64.compose %v195, %v190
    %v200 = vextract.low.u32 %v199
    %v201 = vextract.high.u32 %v199
    %v202 = vmul.u32 %v195, %v186
    %v203 = vadd.s32 %v198, %v200
    %vm204 = vc.u32 %v198, %v200
    %v205 = vadd.s32 %v201, 1
    %v206 = vsel %vm204, %v205, %v201
    %v207 = vadd.s32 %v202, %v206
    %v208 = vadd.s32 %v207, 536870912
    %v209 = vshrl.u32 %v208, 30
    %v210 = vshll.u32 %v209, 30
    %v211 = vsub.s32 %v207, %v210
    %vm212 = vcmp.lt.s32.totalorder %v211, 0
    %v213 = vsub.s32 0, %v211
    %v214 = vsel %vm212, %v213, %v211
    %v215 = vclz %v214
    %v216 = vsub.s32 %v215, 2
    %vm217 = vcmp.gt.s32.totalorder 0, %v216
    %v218 = vsel %vm217, 0, %v216
    %v219 = vsub.s32 32, %v218
    %v220 = vshll.u32 %v211, %v218
    %v221 = vshrl.u32 %v203, %v219
    %v222 = vor.u32 %v220, %v221
    %v223 = vsub.s32 4294967266, %v218
    %v224 = vadd.s32 %v223, 127
    %v225 = vshll.u32 %v224, 23
    %v226 = vor.u32 4788187, %v225
    %v227 = vand.u32 2147483647, %v226
    %v229 = vcvt.s32.f32 %v222
    %v230 = vmul.f32 %v229, %v227
    %v231 = vxor.u32 %v230, 2147483648
    %v232 = vsel %vm149, %v231, %v230
    %v233 = vsub.s32 4, %v209
    %v234 = vsel %vm149, %v233, %v209
    %v235 = vsel %vm148, %v37, %v232
    %v236 = vsel %vm148, 0, %v234
    %v237 = vcosq.f32.pop %v235
    %v238 = vsinq.f32.pop %v235
    %vm239 = vweird.f32 %v37
    %v240 = vadd.s32 %v236, 3
    %v241 = vand.u32 %v240, 3
    %vm242 = vcmp.lt.s32.totalorder %v241, 2
    %vm243 = vcmp.eq.s32.totalorder %v241, 0
    %v244 = vxor.u32 %v238, 2147483648
    %v245 = vsel %vm243, %v237, %v244
    %vm246 = vcmp.eq.s32.totalorder %v241, 2
    %v247 = vxor.u32 %v237, 2147483648
    %v248 = vsel %vm246, %v247, %v238
    %v249 = vsel %vm242, %v245, %v248
    %v250 = vsel %vm239, nan, %v249
    %v251 = vsub.f32 1.0, %v146
    %vm252 = vcmp.gt.f32.partialorder %v30, 1e-06
    %v253 = vmul.f32 %v41, %v41
    %v254 = vmul.f32 %v253, %v251
    %v255 = vadd.f32 %v146, %v254
    %v256 = vsel %vm252, %v255, 1.0
    %257 = vst [vmem:[#allocation5] sm:$0xff] %v256
    %v258 = vmul.f32 %v41, %v42
    %v259 = vmul.f32 %v258, %v251
    %v260 = vmul.f32 %v43, %v250
    %v261 = vsub.f32 %v259, %v260
    %v262 = vsub.f32 0.0, %v25
    %v263 = vsel %vm252, %v261, %v262
    %s264 = sadd.s32 0, 8
    %s265 = scalar_lea.vmem [#allocation5], %s264
    %266 = vst [vmem:[%s265] sm:$0xff] %v263
    %v267 = vmul.f32 %v42, %v250
    %v268 = vmul.f32 %v41, %v43
    %v269 = vmul.f32 %v268, %v251
    %v270 = vadd.f32 %v267, %v269
    %v271 = vsel %vm252, %v270, %v24
    %s272 = sadd.s32 0, 16
    %s273 = scalar_lea.vmem [#allocation5], %s272
    %274 = vst [vmem:[%s273] sm:$0xff] %v271
    %v275 = vadd.f32 %v260, %v259
    %v276 = vsel %vm252, %v275, %v25
    %s277 = sadd.s32 0, 24
    %s278 = scalar_lea.vmem [#allocation5], %s277
    %279 = vst [vmem:[%s278] sm:$0xff] %v276
    %v280 = vmul.f32 %v42, %v42
    %v281 = vmul.f32 %v280, %v251
    %v282 = vadd.f32 %v146, %v281
    %v283 = vsel %vm252, %v282, 1.0
    %s284 = sadd.s32 0, 32
    %s285 = scalar_lea.vmem [#allocation5], %s284
    %286 = vst [vmem:[%s285] sm:$0xff] %v283
    %v287 = vsub.f32 0.0, %v41
    %v288 = vmul.f32 %v287, %v250
    %v289 = vmul.f32 %v42, %v43
    %v290 = vmul.f32 %v289, %v251
    %v291 = vadd.f32 %v288, %v290
    %v292 = vsub.f32 0.0, %v23
    %v293 = vsel %vm252, %v291, %v292
    %s294 = sadd.s32 0, 40
    %s295 = scalar_lea.vmem [#allocation5], %s294
    %296 = vst [vmem:[%s295] sm:$0xff] %v293
    %v297 = vsub.f32 0.0, %v42
    %v298 = vmul.f32 %v297, %v250
    %v299 = vadd.f32 %v298, %v269
    %v300 = vsub.f32 0.0, %v24
    %v301 = vsel %vm252, %v299, %v300
    %s302 = sadd.s32 0, 48
    %s303 = scalar_lea.vmem [#allocation5], %s302
    %304 = vst [vmem:[%s303] sm:$0xff] %v301
    %v305 = vmul.f32 %v41, %v250
    %v306 = vadd.f32 %v305, %v290
    %v307 = vsel %vm252, %v306, %v23
    %s308 = sadd.s32 0, 56
    %s309 = scalar_lea.vmem [#allocation5], %s308
    %310 = vst [vmem:[%s309] sm:$0xff] %v307
    %v311 = vmul.f32 %v43, %v43
    %v312 = vmul.f32 %v311, %v251
    %v313 = vadd.f32 %v146, %v312
    %v314 = vsel %vm252, %v313, 1.0
    %s315 = sadd.s32 0, 64
    %s316 = scalar_lea.vmem [#allocation5], %s315
    %317 = vst [vmem:[%s316] sm:$0xff] %v314
    // Predicated region
    $region10: #{tpu_custom_call.1} parent=1 // pred_check
      _
    $region11: #{tpu_custom_call.1} parent=1 // pred_check_branch
      %319 = sbr.rel (0) target = $region13
    $region12: #{tpu_custom_call.1} parent=1 // pred_region
      %s321 = ssub.s32 1152, 1152
      %322 = vsyncadd [#allocation4], %s321
      %s323 = sshll.u32 [#allocation5], 4
      %s324 = int_to_ptr.vmem [resolvable:$true] %s323
      %329 = dma.vmem_to_hbm [thread:$0]  %s324, 1152, %s1, [#allocation4], 128, 128, 8
    $region13: #{tpu_custom_call.1} parent=1 // pred_fallthru
      _
    // Predicated region
    $region14: #{tpu_custom_call.1} parent=1 // pred_check
      _
    $region15: #{tpu_custom_call.1} parent=1 // pred_check_branch
      %331 = sbr.rel (0) target = $region17
    $region16: #{tpu_custom_call.1} parent=1 // pred_region
      %332 = dma.done [#allocation4], 1152
    $region17: #{tpu_custom_call.1} parent=1 // pred_fallthru
      _
    %333 = vsyncpa [#allocation3], 1
    %334 = vsyncpa [#allocation4], 1

</llo_original>
